<compile_context>
chip_gen: v7x
topology: tpu7x:2x2x1
jax: 0.10.0
libtpu: 0.0.40
codegen_flags: <defaults>
</compile_context>

<pallas_src>
import functools

import jax
import jax.numpy as jnp
import numpy as np
from jax import lax
from jax.experimental import pallas as pl
from jax.experimental.pallas import tpu as pltpu


# ---------------------------------------------------------------------------
# Generation-gated VMEM budgets
# ---------------------------------------------------------------------------
def _vmem_capacity_bytes():
    try:
        info = pltpu.get_tpu_info()
        for attr in ("vmem_capacity_bytes", "vmem_size_bytes", "vmem_bytes"):
            v = getattr(info, attr, None)
            if v:
                return int(v)
    except Exception:
        pass
    return 64 * 1024 * 1024  # conservative fallback (v7x-sized)


_VMEM_CAP = _vmem_capacity_bytes()
if _VMEM_CAP >= 128 * 1024 * 1024:          # v5e / v6e: 128 MiB physical
    _VMEM_LIMIT = 96 * 1024 * 1024
    _CHUNK_BUDGET = 32 * 1024 * 1024
else:                                        # v7x: 64 MiB physical / 32 MiB scoped
    _VMEM_LIMIT = 32 * 1024 * 1024
    _CHUNK_BUDGET = 10 * 1024 * 1024


# ---------------------------------------------------------------------------
# Tiling / padding helpers
# ---------------------------------------------------------------------------
def _round_up(n, m):
    return ((n + m - 1) // m) * m


def _pick_tile(dim, candidates):
    """Largest candidate tile that evenly divides `dim`, else the full dim."""
    for t in candidates:
        if dim >= t and dim % t == 0:
            return t
    return dim


def _pick_t_chunk(T, Bc, Hp, xp_itemsize, out_itemsize, budget_bytes):
    """Timesteps per grid step so the double-buffered xp+out blocks (plus the
    resident w_hh block and hidden-state scratch) stay under the VMEM budget."""
    fixed = Hp * 3 * Hp * xp_itemsize * 2          # w_hh (double-buffered)
    fixed += Bc * Hp * 4                           # hidden-state scratch (f32)
    fixed += 2 * Hp * 4 * 2                        # b_hn (tiny)
    per_t = (Bc * 3 * Hp * xp_itemsize + Bc * Hp * out_itemsize) * 2  # xp + out, x2 buffers
    avail = max(budget_bytes - fixed, per_t)
    cap = max(1, avail // per_t)
    tc = int(min(T, cap, 512))
    while T % tc:                                  # largest divisor of T <= cap
        tc -= 1
    return tc


def _pad_gate_cols(w_t, H, Hp):
    """(K, 3H) -> (K, 3Hp) with gate blocks r|z|n placed at lane offsets 0, Hp, 2Hp."""
    if Hp == H:
        return w_t
    K = w_t.shape[0]
    out = jnp.zeros((K, 3 * Hp), w_t.dtype)
    for g in range(3):
        out = out.at[:, g * Hp: g * Hp + H].set(w_t[:, g * H:(g + 1) * H])
    return out


def _pad_gate_vec(v, H, Hp):
    """(3H,) -> (3Hp,) with gate blocks at offsets 0, Hp, 2Hp (zeros elsewhere)."""
    if Hp == H:
        return v
    out = jnp.zeros((3 * Hp,), v.dtype)
    for g in range(3):
        out = out.at[g * Hp: g * Hp + H].set(v[g * H:(g + 1) * H])
    return out


# ---------------------------------------------------------------------------
# Kernel 1: tiled matmul + bias (+ optional tanh).  Used for the GRU input
# projection (all timesteps at once) and for fc_output_layer + Tanh.
# ---------------------------------------------------------------------------
def _matmul_bias_kernel(a_ref, w_ref, b_ref, o_ref, acc_ref, *, activation):
    @pl.when(pl.program_id(2) == 0)
    def _():
        acc_ref[...] = jnp.zeros_like(acc_ref)

    acc_ref[...] += jnp.dot(a_ref[...], w_ref[...],
                            preferred_element_type=jnp.float32)

    @pl.when(pl.program_id(2) == pl.num_programs(2) - 1)
    def _():
        out = acc_ref[...] + b_ref[...]
        if activation == "tanh":
            out = jnp.tanh(out)
        o_ref[...] = out.astype(o_ref.dtype)


def matmul_bias(a, w, b, activation=None, out_dtype=jnp.float32):
    """a: (M, K), w: (K, N), b: (N,) f32 -> (M, N) out_dtype.  f32 accumulation."""
    M, K = a.shape
    K2, N = w.shape
    assert K == K2
    # Sublane tiles must be multiples of 16 for bf16 operands / outputs.
    sub_min = 16 if (a.dtype == jnp.bfloat16 or jnp.dtype(out_dtype) == jnp.bfloat16) else 8
    tm_cands = tuple(t for t in (512, 256, 128, 64, 32, 16, 8) if t >= sub_min)
    tm = _pick_tile(M, tm_cands)
    tn = _pick_tile(N, (512, 256, 128))
    tk = _pick_tile(K, (512, 256, 128))
    grid = (M // tm, N // tn, K // tk)
    return pl.pallas_call(
        functools.partial(_matmul_bias_kernel, activation=activation),
        out_shape=jax.ShapeDtypeStruct((M, N), out_dtype),
        grid=grid,
        in_specs=[
            pl.BlockSpec((tm, tk), lambda i, j, k: (i, k)),
            pl.BlockSpec((tk, tn), lambda i, j, k: (k, j)),
            pl.BlockSpec((1, tn), lambda i, j, k: (0, j)),
        ],
        out_specs=pl.BlockSpec((tm, tn), lambda i, j, k: (i, j)),
        scratch_shapes=[pltpu.VMEM((tm, tn), jnp.float32)],
        compiler_params=pltpu.CompilerParams(
            dimension_semantics=("parallel", "parallel", "arbitrary"),
            vmem_limit_bytes=_VMEM_LIMIT,
        ),
    )(a, w, b.reshape(1, N))


# ---------------------------------------------------------------------------
# Kernel 2: GRU recurrence, T-chunked.
#   grid = (batch_blocks, T // t_chunk); batch axis "parallel" (megacore),
#   time axis "arbitrary" with the hidden state carried in f32 VMEM scratch.
#   One fused (Bc,Hp)@(Hp,3Hp) bf16 matmul per timestep (f32 accumulation);
#   gates read via 128-aligned lane slices of the (Bc,3Hp) result.
#   PyTorch gate order (r, z, n) and update rule reproduced exactly.
# ---------------------------------------------------------------------------
def _gru_chunk_kernel(xp_ref, whh_ref, bhn_ref, hseq_ref, h_scr):
    c = pl.program_id(1)                  # time-chunk index (restarts per batch block)

    @pl.when(c == 0)
    def _():
        h_scr[...] = jnp.zeros_like(h_scr)

    tc = xp_ref.shape[0]
    Bc = xp_ref.shape[1]
    Hp = hseq_ref.shape[2]
    w = whh_ref[...]                                              # resident across steps
    b_hn = jnp.broadcast_to(bhn_ref[...], (Bc, Hp)).astype(jnp.float32)  # hoisted broadcast

    def step(t, h_prev):
        xg = xp_ref[t].astype(jnp.float32)                        # (Bc, 3Hp), biases (r,z,n_ih) folded
        gh = jnp.dot(h_prev.astype(w.dtype), w,
                     preferred_element_type=jnp.float32)          # (Bc, 3Hp), bf16 MXU / f32 acc
        r = jax.nn.sigmoid(xg[:, :Hp] + gh[:, :Hp])
        z = jax.nn.sigmoid(xg[:, Hp:2 * Hp] + gh[:, Hp:2 * Hp])
        n = jnp.tanh(xg[:, 2 * Hp:] + r * (gh[:, 2 * Hp:] + b_hn))
        h_new = (1.0 - z) * n + z * h_prev
        hseq_ref[t] = h_new.astype(hseq_ref.dtype)
        return h_new

    if tc <= 16:
        unroll = True
    elif Hp >= 256:
        unroll = 4          # limit live vregs at large H (v5e single vst slot)
    else:
        unroll = 8
    h_scr[...] = lax.fori_loop(0, tc, step, h_scr[...], unroll=unroll)


def gru_layer(xp, w_hh_cat, b_hn, out_dtype=jnp.float32):
    """xp: (T, B, 3Hp) input projection (r/z biases + n's b_ih folded in);
    w_hh_cat: (Hp, 3Hp) = padded w_hh.T;  b_hn: (1, Hp) f32.  Returns (T, B, Hp)."""
    T, B, G = xp.shape
    Hp = G // 3
    # Megacore split only when each half still has a healthy number of rows and
    # stays 16-sublane aligned (splitting a thin batch just wastes MXU rows).
    if B % 32 == 0 and (B // 2) >= 64:
        Bc = B // 2
    else:
        Bc = B
    tc = _pick_t_chunk(T, Bc, Hp,
                       jnp.dtype(xp.dtype).itemsize,
                       jnp.dtype(out_dtype).itemsize,
                       _CHUNK_BUDGET)
    grid = (B // Bc, T // tc)
    return pl.pallas_call(
        _gru_chunk_kernel,
        out_shape=jax.ShapeDtypeStruct((T, B, Hp), out_dtype),
        grid=grid,
        in_specs=[
            pl.BlockSpec((tc, Bc, G), lambda b, c: (c, b, 0)),
            pl.BlockSpec((Hp, G), lambda b, c: (0, 0)),
            pl.BlockSpec((1, Hp), lambda b, c: (0, 0)),
        ],
        out_specs=pl.BlockSpec((tc, Bc, Hp), lambda b, c: (c, b, 0)),
        scratch_shapes=[pltpu.VMEM((Bc, Hp), jnp.float32)],
        compiler_params=pltpu.CompilerParams(
            dimension_semantics=("parallel", "arbitrary"),
            vmem_limit_bytes=_VMEM_LIMIT,
        ),
    )(xp, w_hh_cat, b_hn)


# ---------------------------------------------------------------------------
# Parameter init (deterministic, PyTorch-like uniform(-1/sqrt(H), 1/sqrt(H)))
# ---------------------------------------------------------------------------
def init_params(key, input_size, hidden_size, num_layers, output_size):
    params = {"layers": []}
    keys = jax.random.split(key, num_layers * 4 + 2)
    k = 0
    scale = 1.0 / np.sqrt(hidden_size)
    in_dim = input_size
    for _ in range(num_layers):
        w_ih = jax.random.uniform(keys[k], (3 * hidden_size, in_dim),
                                  minval=-scale, maxval=scale, dtype=jnp.float32); k += 1
        w_hh = jax.random.uniform(keys[k], (3 * hidden_size, hidden_size),
                                  minval=-scale, maxval=scale, dtype=jnp.float32); k += 1
        b_ih = jax.random.uniform(keys[k], (3 * hidden_size,),
                                  minval=-scale, maxval=scale, dtype=jnp.float32); k += 1
        b_hh = jax.random.uniform(keys[k], (3 * hidden_size,),
                                  minval=-scale, maxval=scale, dtype=jnp.float32); k += 1
        params["layers"].append(dict(w_ih=w_ih, w_hh=w_hh, b_ih=b_ih, b_hh=b_hh))
        in_dim = hidden_size
    params["w_fc"] = jax.random.uniform(keys[k], (output_size, hidden_size),
                                        minval=-scale, maxval=scale, dtype=jnp.float32); k += 1
    params["b_fc"] = jax.random.uniform(keys[k], (output_size,),
                                        minval=-scale, maxval=scale, dtype=jnp.float32)
    return params


# ---------------------------------------------------------------------------
# Full forward pass (GRU branch of SequenceModel.forward)
# ---------------------------------------------------------------------------
def sequence_model_forward(x, params, hidden_size, matmul_dtype=jnp.bfloat16):
    # x: (B, input_size, T).  matmul_dtype controls MXU operand + intermediate
    # (xp / h_seq) dtype; accumulation and gate math stay f32.  Final output is f32.
    B, I, T = x.shape
    H = hidden_size
    Hp = _round_up(H, 128)                            # lane-aligned hidden size
    O = params["w_fc"].shape[0]
    Op = _round_up(max(O, 1), 128)                    # lane-dense FC output, sliced after

    # Time-major, flattened (T*B, feat): one transpose on entry, no inter-layer
    # HBM transposes.
    cur = jnp.transpose(x, (2, 0, 1)).reshape(T * B, I).astype(matmul_dtype)

    for li, layer in enumerate(params["layers"]):
        w_ih_t = jnp.transpose(layer["w_ih"])                     # (in_dim, 3H)
        if li > 0:
            w_ih_t = jnp.pad(w_ih_t, ((0, Hp - H), (0, 0)))       # K dim follows padded h_seq
        w_ih_t = _pad_gate_cols(w_ih_t, H, Hp).astype(matmul_dtype)  # (K, 3Hp)
        # Fold b_ih + b_hh[r], b_hh[z] into the precomputed projection bias;
        # b_hh[n] must stay per-step inside r*(hn + b_hn).
        b_comb = layer["b_ih"] + jnp.concatenate(
            [layer["b_hh"][:2 * H], jnp.zeros((H,), jnp.float32)])
        b_comb = _pad_gate_vec(b_comb, H, Hp)                     # (3Hp,), f32

        xp = matmul_bias(cur, w_ih_t, b_comb, out_dtype=matmul_dtype)   # (T*B, 3Hp)
        xp = xp.reshape(T, B, 3 * Hp)                                   # contiguous, free

        w_hh_t = jnp.pad(jnp.transpose(layer["w_hh"]), ((0, Hp - H), (0, 0)))  # (Hp, 3H)
        w_hh_cat = _pad_gate_cols(w_hh_t, H, Hp).astype(matmul_dtype)          # (Hp, 3Hp)
        b_hn = jnp.pad(layer["b_hh"][2 * H:], (0, Hp - H)).reshape(1, Hp)      # f32

        h_seq = gru_layer(xp, w_hh_cat, b_hn, out_dtype=matmul_dtype)   # (T, B, Hp)
        cur = h_seq.reshape(T * B, Hp)

    # fc_output_layer + Tanh (fused into the tiled Pallas matmul), lane-dense output
    w_fc_t = jnp.pad(jnp.transpose(params["w_fc"]),
                     ((0, Hp - H), (0, Op - O))).astype(matmul_dtype)   # (Hp, Op)
    b_fc = jnp.pad(params["b_fc"], (0, Op - O))                         # (Op,), f32
    o = matmul_bias(cur, w_fc_t, b_fc, activation="tanh",
                    out_dtype=jnp.float32)                              # (T*B, Op)
    o = o.reshape(T, B, Op)[:, :, :O]
    return jnp.transpose(o, (1, 2, 0))                                  # (B, O, T)


# ---------------------------------------------------------------------------
# Pure-JAX reference (mirrors torch.nn.GRU + Linear + Tanh) for validation
# ---------------------------------------------------------------------------
def reference_forward(x, params, hidden_size):
    B, I, T = x.shape
    H = hidden_size
    cur = jnp.transpose(x, (0, 2, 1))                         # (B, T, in)
    for layer in params["layers"]:
        w_ih, w_hh, b_ih, b_hh = layer["w_ih"], layer["w_hh"], layer["b_ih"], layer["b_hh"]
        h = jnp.zeros((B, H), jnp.float32)
        outs = []
        for t in range(T):
            xt = cur[:, t, :]
            gi = xt @ w_ih.T + b_ih
            gh = h @ w_hh.T + b_hh
            ir, iz, inn = gi[:, :H], gi[:, H:2 * H], gi[:, 2 * H:]
            hr, hz, hn = gh[:, :H], gh[:, H:2 * H], gh[:, 2 * H:]
            r = jax.nn.sigmoid(ir + hr)
            z = jax.nn.sigmoid(iz + hz)
            n = jnp.tanh(inn + r * hn)
            h = (1.0 - z) * n + z * h
            outs.append(h)
        cur = jnp.stack(outs, axis=1)                         # (B, T, H)
    o = jnp.tanh(cur @ params["w_fc"].T + params["b_fc"])
    return jnp.transpose(o, (0, 2, 1))                        # (B, O, T)


if __name__ == "__main__":
    B, input_size, hidden_size, output_size, T = 2, 16, 32, 8, 8
    num_layers = 2

    key = jax.random.PRNGKey(0)
    kx, kp = jax.random.split(key)
    x = jax.random.normal(kx, (B, input_size, T), dtype=jnp.float32)
    params = init_params(kp, input_size, hidden_size, num_layers, output_size)

    ref = reference_forward(x, params, hidden_size)

    # f32 operand path: strict numerical check against the PyTorch-equivalent reference.
    out_f32 = jax.block_until_ready(
        sequence_model_forward(x, params, hidden_size, matmul_dtype=jnp.float32))
    assert out_f32.shape == (B, output_size, T)
    np.testing.assert_allclose(np.asarray(out_f32), np.asarray(ref), atol=1e-4, rtol=1e-4)

    # Default bf16-operand / bf16-intermediate path (f32 accumulation & gate math):
    # loose tolerance per bf16 precision.
    out_bf16 = jax.block_until_ready(sequence_model_forward(x, params, hidden_size))
    assert out_bf16.shape == (B, output_size, T)
    np.testing.assert_allclose(np.asarray(out_bf16), np.asarray(ref), atol=1e-1, rtol=1e-1)

    print("KERNEL_OK")
</pallas_src>

<mosaic_0001>
module attributes {stable_mosaic.version = 11 : i64} {
  func.func @_matmul_bias_kernel(%arg0: i32, %arg1: i32, %arg2: i32, %arg3: memref<16x16xf32, #tpu.memory_space<vmem>>, %arg4: memref<16x128xf32, #tpu.memory_space<vmem>>, %arg5: memref<1x128xf32, #tpu.memory_space<vmem>>, %arg6: memref<16x128xf32, #tpu.memory_space<vmem>>, %arg7: memref<16x128xf32, #tpu.memory_space<vmem>>) attributes {dimension_semantics = [#tpu.dimension_semantics<parallel>, #tpu.dimension_semantics<parallel>, #tpu.dimension_semantics<arbitrary>], iteration_bounds = array<i64: 1, 3, 1>, scalar_prefetch = 0 : i64, scratch_operands = 1 : i64, tpu.core_type = #tpu.core_type<tc>, window_params = [{transform_indices = @transform_0, window_bounds = array<i64: 16, 16>}, {transform_indices = @transform_1, window_bounds = array<i64: 16, 128>}, {transform_indices = @transform_2, window_bounds = array<i64: 1, 128>}, {transform_indices = @transform_3, window_bounds = array<i64: 16, 128>}]} {
    %c0_i32 = arith.constant 0 : i32
    %0 = arith.cmpi eq, %arg2, %c0_i32 : i32
    %1 = arith.extui %0 : i1 to i32
    %c0_i32_0 = arith.constant 0 : i32
    %2 = arith.cmpi ne, %1, %c0_i32_0 : i32
    scf.if %2 {
      %cst_10 = arith.constant 0.000000e+00 : f32
      %12 = vector.broadcast %cst_10 : f32 to vector<16x128xf32>
      %c0_11 = arith.constant 0 : index
      %c0_12 = arith.constant 0 : index
      %13 = vector.load %arg7[%c0_11, %c0_12] : memref<16x128xf32, #tpu.memory_space<vmem>>, vector<16x128xf32>
      tpu.vector_store %arg7[%c0_11, %c0_12], %12 {strides = array<i32>} : memref<16x128xf32, #tpu.memory_space<vmem>>, vector<16x128xf32>,
    } else {
    }
    %c0 = arith.constant 0 : index
    %c0_1 = arith.constant 0 : index
    %3 = vector.load %arg7[%c0, %c0_1] : memref<16x128xf32, #tpu.memory_space<vmem>>, vector<16x128xf32>
    %c0_2 = arith.constant 0 : index
    %c0_3 = arith.constant 0 : index
    %4 = vector.load %arg3[%c0_2, %c0_3] : memref<16x16xf32, #tpu.memory_space<vmem>>, vector<16x16xf32>
    %c0_4 = arith.constant 0 : index
    %c0_5 = arith.constant 0 : index
    %5 = vector.load %arg4[%c0_4, %c0_5] : memref<16x128xf32, #tpu.memory_space<vmem>>, vector<16x128xf32>
    %cst = arith.constant dense<0.000000e+00> : vector<16x128xf32>
    %6 = tpu.matmul %4, %5, %cst {dimension_numbers = #tpu.dot_dimension_numbers<[1], [0], [0], [1], [0, 0, 1, 1], [], []>} : vector<16x16xf32>, vector<16x128xf32>, vector<16x128xf32> -> vector<16x128xf32>
    %7 = arith.addf %3, %6 : vector<16x128xf32>
    %c0_6 = arith.constant 0 : index
    %c0_7 = arith.constant 0 : index
    %8 = vector.load %arg7[%c0_6, %c0_7] : memref<16x128xf32, #tpu.memory_space<vmem>>, vector<16x128xf32>
    tpu.vector_store %arg7[%c0_6, %c0_7], %7 {strides = array<i32>} : memref<16x128xf32, #tpu.memory_space<vmem>>, vector<16x128xf32>,
    %c0_i32_8 = arith.constant 0 : i32
    %9 = arith.cmpi eq, %arg2, %c0_i32_8 : i32
    %10 = arith.extui %9 : i1 to i32
    %c0_i32_9 = arith.constant 0 : i32
    %11 = arith.cmpi ne, %10, %c0_i32_9 : i32
    scf.if %11 {
      %c0_10 = arith.constant 0 : index
      %c0_11 = arith.constant 0 : index
      %12 = vector.load %arg7[%c0_10, %c0_11] : memref<16x128xf32, #tpu.memory_space<vmem>>, vector<16x128xf32>
      %c0_12 = arith.constant 0 : index
      %c0_13 = arith.constant 0 : index
      %13 = vector.load %arg5[%c0_12, %c0_13] : memref<1x128xf32, #tpu.memory_space<vmem>>, vector<1x128xf32>
      %14 = vector.broadcast %13 : vector<1x128xf32> to vector<16x128xf32>
      %15 = arith.addf %12, %14 : vector<16x128xf32>
      %c0_14 = arith.constant 0 : index
      %c0_15 = arith.constant 0 : index
      %16 = vector.load %arg6[%c0_14, %c0_15] : memref<16x128xf32, #tpu.memory_space<vmem>>, vector<16x128xf32>
      tpu.vector_store %arg6[%c0_14, %c0_15], %15 {strides = array<i32>} : memref<16x128xf32, #tpu.memory_space<vmem>>, vector<16x128xf32>,
    } else {
    }
    return
  }
  func.func @transform_0(%arg0: i32, %arg1: i32, %arg2: i32) -> (i32, i32) {
    %c0_i32 = arith.constant 0 : i32
    return %arg0, %arg2 : i32, i32
  }
  func.func @transform_1(%arg0: i32, %arg1: i32, %arg2: i32) -> (i32, i32) {
    %c0_i32 = arith.constant 0 : i32
    return %arg2, %arg1 : i32, i32
  }
  func.func @transform_2(%arg0: i32, %arg1: i32, %arg2: i32) -> (i32, i32) {
    %c0_i32 = arith.constant 0 : i32
    %c0_i32_0 = arith.constant 0 : i32
    return %c0_i32, %arg1 : i32, i32
  }
  func.func @transform_3(%arg0: i32, %arg1: i32, %arg2: i32) -> (i32, i32) {
    %c0_i32 = arith.constant 0 : i32
    return %arg0, %arg1 : i32, i32
  }
}

</mosaic_0001>

<llo_original>
// kernel: tpu_custom_call.1
$region0: #{tpu_custom_call.1}
  #allocation0 [shape = 'u32[]', space=smem, size = 0x4, offset = 0x4, fixed_abs, tag = 'smem constant byte address 0x4 - core index']
  #allocation1 [shape = 'u32[144,128]{1,0:T(1,128)}', space=vmem, size = 0x12000, scoped, tag = 'internal scratch']
  #allocation2 [shape = 'f32[16,128]{1,0:T(8,128)}', space=vmem, size = 0x2000, scoped, tag = 'scratch operand']
  %s0 = inlined_call_operand.hbm [shape: f32[16,16], index: 0, kind: input, shape index: {}]
  %s1 = inlined_call_operand.hbm [shape: f32[16,384], index: 1, kind: input, shape index: {}]
  %s2 = inlined_call_operand.vmem [shape: f32[1,384], index: 2, kind: input, shape index: {}]
  %s3 = inlined_call_operand.hbm [shape: f32[16,384], index: 3, kind: output, shape index: {}]
  %s4 = sld [smem:[#allocation0]]
  $region61: #{tpu_custom_call.1} parent=0
    _
  %s6 = ssub.s32 1, %s4
  %s7 = scalar_select 0, %s6, %s4
  $region1: #{tpu_custom_call.1} parent=0
    #allocation3 [shape = 'u8[8192]{0}', space=vmem, size = 0x2000, scoped, tag = 'input window, operand 0, single buffered']
    #allocation4 [shape = 's32[2]{0}', space=sflag, size = 0x8, scoped, tag = 'scoped memory for tpu_custom_call.1']
    #allocation5 [shape = 's32[2]{0}', space=sflag, size = 0x8, scoped, tag = 'scoped memory for tpu_custom_call.1']
    #allocation6 [shape = 'u8[16384]{0}', space=vmem, size = 0x4000, scoped, tag = 'input window, operand 1']
    #allocation7 [shape = 's32[2]{0}', space=sflag, size = 0x8, scoped, tag = 'scoped memory for tpu_custom_call.1']
    #allocation8 [shape = 'u8[16384]{0}', space=vmem, size = 0x4000, scoped, tag = 'output window, operand 0']
    %8 = vsyncpa [#allocation4], 0
    %9 = vsyncpa [#allocation7], 0
    %s10 = scalar_lea.sflag [#allocation7], 1
    %11 = vsyncpa %s10, 0
    %12 = vsyncpa [#allocation5], 0
    %s13 = scalar_lea.sflag [#allocation5], 1
    %14 = vsyncpa %s13, 0
    loop: start=0, step=1, limit=5
    $region2: #{tpu_custom_call.1} parent=1 // loop_pre_header
      _
    $region3: #{tpu_custom_call.1} parent=1 // loop_header
      %s16 = sphi 0, %s20
      %p17 = scmp.ge.s32.totalorder %s16, 5
      %s23 = sphi 0, %s42
      %s24 = sphi 0, %s38
      %s25 = sphi 0, %s34
      %s26 = sphi 0, %s23
      %s27 = sphi 0, %s24
      %s28 = sphi 0, %s25
      %s29 = sphi 0, %s26
      %s30 = sphi 0, %s27
      %s31 = sphi 0, %s28
      %s47 = sphi 0, %s49
      %s50 = sphi 0, %s47
      %s51 = sphi 0, %s50
      %s67 = sphi 0, %s51
      %s75 = sphi 0, %s77
      %s78 = sphi 0, %s75
      %s79 = sphi 0, %s78
      %s95 = sphi 0, %s79
      %s101 = sphi 0, %s103
      %s104 = sphi 0, %s101
      %s105 = sphi 0, %s104
      %s121 = sphi 0, %s105
      %s129 = sphi 0, %s131
      %s132 = sphi 0, %s129
      %s133 = sphi 0, %s132
      %s149 = sphi 0, %s133
    $region4: #{tpu_custom_call.1} parent=1 // loop_header_branch
      %19 = sbr.rel (%p17) target = $region8
    $region5: #{tpu_custom_call.1} parent=1 // loop_body
      %s21 = ssub.s32 %s16, 1
      %s22 = ssub.s32 %s16, 2
      %s32 = sadd.s32 1, %s25
      %p33 = scmp.ge.s32.totalorder %s32, 1
      %s34 = scalar_select %p33, 0, %s32
      %s35 = sadd.s32 1, %s24
      %s36 = scalar_select %p33, %s35, %s24
      %p37 = scmp.ge.s32.totalorder %s36, 3
      %s38 = scalar_select %p37, 0, %s36
      %s39 = sadd.s32 1, %s23
      %s40 = scalar_select %p37, %s39, %s23
      %p41 = scmp.ge.s32.totalorder %s40, 1
      %s42 = scalar_select %p41, 0, %s40
      %s43 = ssub.s32 %s23, %s42
      %s44 = ssub.s32 %s25, %s34
      %s45 = sor.u32 %s43, %s44
      %p46 = scmp.eq.s32.totalorder %s45, 0
      %s48 = sadd.s32 %s47, 1
      %s49 = scalar_select %p46, %s47, %s48
      %p52 = pneg %p46
      %p53 = scmp.eq.s32.totalorder %s16, 2
      %p54 = por %p52, %p53
      %p55 = scmp.ne.s32.totalorder %s47, %s50
      %p56 = scmp.eq.s32.totalorder %s16, 0
      %p57 = por %p55, %p56
      %p58 = scmp.ne.s32.totalorder %s47, %s50
      %p59 = scmp.eq.s32.totalorder %s21, 2
      %p60 = por %p58, %p59
      %p61 = scmp.ne.s32.totalorder %s50, %s51
      %p62 = scmp.eq.s32.totalorder %s21, 0
      %p63 = por %p61, %p62
      %p64 = scmp.ne.s32.totalorder %s50, %s51
      %p65 = scmp.eq.s32.totalorder %s22, 2
      %p66 = por %p64, %p65
      %p68 = scmp.ne.s32.totalorder %s51, %s67
      %p69 = scmp.eq.s32.totalorder %s22, 0
      %p70 = por %p68, %p69
      %s71 = ssub.s32 %s25, %s34
      %s72 = ssub.s32 %s24, %s38
      %s73 = sor.u32 %s71, %s72
      %p74 = scmp.eq.s32.totalorder %s73, 0
      %s76 = sadd.s32 %s75, 1
      %s77 = scalar_select %p74, %s75, %s76
      %p80 = pneg %p74
      %p81 = scmp.eq.s32.totalorder %s16, 2
      %p82 = por %p80, %p81
      %p83 = scmp.ne.s32.totalorder %s75, %s78
      %p84 = scmp.eq.s32.totalorder %s16, 0
      %p85 = por %p83, %p84
      %p86 = scmp.ne.s32.totalorder %s75, %s78
      %p87 = scmp.eq.s32.totalorder %s21, 2
      %p88 = por %p86, %p87
      %p89 = scmp.ne.s32.totalorder %s78, %s79
      %p90 = scmp.eq.s32.totalorder %s21, 0
      %p91 = por %p89, %p90
      %p92 = scmp.ne.s32.totalorder %s78, %s79
      %p93 = scmp.eq.s32.totalorder %s22, 2
      %p94 = por %p92, %p93
      %p96 = scmp.ne.s32.totalorder %s79, %s95
      %p97 = scmp.eq.s32.totalorder %s22, 0
      %p98 = por %p96, %p97
      %s99 = ssub.s32 %s24, %s38
      %p100 = scmp.eq.s32.totalorder %s99, 0
      %s102 = sadd.s32 %s101, 1
      %s103 = scalar_select %p100, %s101, %s102
      %p106 = pneg %p100
      %p107 = scmp.eq.s32.totalorder %s16, 2
      %p108 = por %p106, %p107
      %p109 = scmp.ne.s32.totalorder %s101, %s104
      %p110 = scmp.eq.s32.totalorder %s16, 0
      %p111 = por %p109, %p110
      %p112 = scmp.ne.s32.totalorder %s101, %s104
      %p113 = scmp.eq.s32.totalorder %s21, 2
      %p114 = por %p112, %p113
      %p115 = scmp.ne.s32.totalorder %s104, %s105
      %p116 = scmp.eq.s32.totalorder %s21, 0
      %p117 = por %p115, %p116
      %p118 = scmp.ne.s32.totalorder %s104, %s105
      %p119 = scmp.eq.s32.totalorder %s22, 2
      %p120 = por %p118, %p119
      %p122 = scmp.ne.s32.totalorder %s105, %s121
      %p123 = scmp.eq.s32.totalorder %s22, 0
      %p124 = por %p122, %p123
      %s125 = ssub.s32 %s23, %s42
      %s126 = ssub.s32 %s24, %s38
      %s127 = sor.u32 %s125, %s126
      %p128 = scmp.eq.s32.totalorder %s127, 0
      %s130 = sadd.s32 %s129, 1
      %s131 = scalar_select %p128, %s129, %s130
      %p134 = pneg %p128
      %p135 = scmp.eq.s32.totalorder %s16, 2
      %p136 = por %p134, %p135
      %p137 = scmp.ne.s32.totalorder %s129, %s132
      %p138 = scmp.eq.s32.totalorder %s16, 0
      %p139 = por %p137, %p138
      %p140 = scmp.ne.s32.totalorder %s129, %s132
      %p141 = scmp.eq.s32.totalorder %s21, 2
      %p142 = por %p140, %p141
      %p143 = scmp.ne.s32.totalorder %s132, %s133
      %p144 = scmp.eq.s32.totalorder %s21, 0
      %p145 = por %p143, %p144
      %p146 = scmp.ne.s32.totalorder %s132, %s133
      %p147 = scmp.eq.s32.totalorder %s22, 2
      %p148 = por %p146, %p147
      %p150 = scmp.ne.s32.totalorder %s133, %s149
      %p151 = scmp.eq.s32.totalorder %s22, 0
      %p152 = por %p150, %p151
      %p153 = scmp.le.s32.totalorder 1, %s16
      %p154 = scmp.lt.s32.totalorder %s16, 4
      %p155 = pnand %p153, %p154
      %p156 = pneg %p155
      // Predicated region
      $region9: #{tpu_custom_call.1} parent=5 // pred_check
        _
      $region10: #{tpu_custom_call.1} parent=5 // pred_check_branch
        %158 = sbr.rel (%p155) target = $region12
      $region11: #{tpu_custom_call.1} parent=5 // pred_region
        %s159 = ssub.s32 %s16, 1
        // Predicated region
        $region13: #{tpu_custom_call.1} parent=11 // pred_check
          %p160 = pneg %p63
        $region14: #{tpu_custom_call.1} parent=11 // pred_check_branch
          %162 = sbr.rel (%p160) target = $region16
        $region15: #{tpu_custom_call.1} parent=11 // pred_region
          %s163 = smul.u32 2, %s26
          %s165 = ssub.s32 256, 256
          %166 = vsyncadd [#allocation4], %s165
          %s167 = sadd.s32 %s28, %s163
          %s168 = smul.addr %s167, 128
          %s169 = scalar_lea.hbm %s0, %s168
          %s170 = sshll.u32 [#allocation3], 4
          %s171 = int_to_ptr.vmem [resolvable:$true] %s170
          %176 = dma.hbm_to_vmem [thread:$0]  %s169, 256, %s171, [#allocation4], 128, 128, 8
        $region16: #{tpu_custom_call.1} parent=11 // pred_fallthru
          _
      $region12: #{tpu_custom_call.1} parent=5 // pred_fallthru
        _
      %p177 = scmp.lt.s32.totalorder %s16, 3
      // Predicated region
      $region17: #{tpu_custom_call.1} parent=5 // pred_check
        %p178 = pneg %p177
      $region18: #{tpu_custom_call.1} parent=5 // pred_check_branch
        %180 = sbr.rel (%p178) target = $region20
      $region19: #{tpu_custom_call.1} parent=5 // pred_region
        // Predicated region
        $region21: #{tpu_custom_call.1} parent=19 // pred_check
          %p181 = pneg %p85
        $region22: #{tpu_custom_call.1} parent=19 // pred_check_branch
          %183 = sbr.rel (%p181) target = $region24
        $region23: #{tpu_custom_call.1} parent=19 // pred_region
          %s184 = sand.u32 %s75, 1
          %s185 = scalar_lea.sflag [#allocation7], %s184
          %s186 = sand.u32 %s75, 1
          %s187 = smul.addr %s186, 16
          %s188 = scalar_lea.vmem [#allocation6], %s187
          %s189 = smul.u32 2, %s25
          %s191 = ssub.s32 256, 256
          %192 = vsyncadd %s185, %s191
          %s193 = smul.addr %s189, 3
          %s194 = sadd.s32 %s24, %s193
          %s195 = smul.addr %s194, 128
          %s196 = scalar_lea.hbm %s1, %s195
          %s197 = sshll.u32 %s188, 4
          %s198 = int_to_ptr.vmem [resolvable:$true] %s197
          %203 = dma.hbm_to_vmem [thread:$0]  %s196, 256, %s198, %s185, 384, 128, 8
        $region24: #{tpu_custom_call.1} parent=19 // pred_fallthru
          _
        // Predicated region
        $region25: #{tpu_custom_call.1} parent=19 // pred_check
          %p204 = pneg %p111
        $region26: #{tpu_custom_call.1} parent=19 // pred_check_branch
          %206 = sbr.rel (%p204) target = $region28
        $region27: #{tpu_custom_call.1} parent=19 // pred_region
          %p207 = scmp.lt.s32.totalorder %s24, 2
          %s208 = scalar_select %p207, %s24, 2
          %s209 = scalar_lea.vmem %s2, %s208
        $region28: #{tpu_custom_call.1} parent=19 // pred_fallthru
          _
      $region20: #{tpu_custom_call.1} parent=5 // pred_fallthru
        _
      %p210 = scmp.le.s32.totalorder 1, %s16
      %p211 = scmp.lt.s32.totalorder %s16, 4
      %p212 = pnand %p210, %p211
      %p213 = pneg %p212
      // Predicated region
      $region29: #{tpu_custom_call.1} parent=5 // pred_check
        _
      $region30: #{tpu_custom_call.1} parent=5 // pred_check_branch
        %215 = sbr.rel (%p212) target = $region32
      $region31: #{tpu_custom_call.1} parent=5 // pred_region
        %s216 = ssub.s32 %s16, 1
        // Predicated region
        $region33: #{tpu_custom_call.1} parent=31 // pred_check
          %p217 = pneg %p63
        $region34: #{tpu_custom_call.1} parent=31 // pred_check_branch
          %219 = sbr.rel (%p217) target = $region36
        $region35: #{tpu_custom_call.1} parent=31 // pred_region
          %220 = dma.done [#allocation4], 256
        $region36: #{tpu_custom_call.1} parent=31 // pred_fallthru
          _
        %s221 = sand.u32 %s78, 1
        %s222 = scalar_lea.sflag [#allocation7], %s221
        %s223 = sand.u32 %s78, 1
        %s224 = smul.addr %s223, 16
        %s225 = scalar_lea.vmem [#allocation6], %s224
        // Predicated region
        $region37: #{tpu_custom_call.1} parent=31 // pred_check
          %p226 = pneg %p91
        $region38: #{tpu_custom_call.1} parent=31 // pred_check_branch
          %228 = sbr.rel (%p226) target = $region40
        $region39: #{tpu_custom_call.1} parent=31 // pred_region
          %229 = dma.done %s222, 256
        $region40: #{tpu_custom_call.1} parent=31 // pred_fallthru
          _
        %p230 = pneg %p63
        %p231 = pneg %p60
        %s232 = sand.u32 %s78, 1
        %s233 = scalar_lea.sflag [#allocation7], %s232
        %s234 = sand.u32 %s78, 1
        %s235 = smul.addr %s234, 16
        %s236 = scalar_lea.vmem [#allocation6], %s235
        %p237 = pneg %p91
        %p238 = pneg %p88
        %p239 = scmp.lt.s32.totalorder %s27, 2
        %s240 = scalar_select %p239, %s27, 2
        %s241 = scalar_lea.vmem %s2, %s240
        %p242 = pneg %p117
        %p243 = pneg %p114
        %p244 = pneg %p145
        %p245 = pneg %p142
        %s246 = sand.u32 %s132, 1
        %s247 = scalar_lea.sflag [#allocation5], %s246
        %s248 = sand.u32 %s132, 1
        %s249 = smul.addr %s248, 16
        %s250 = scalar_lea.vmem [#allocation8], %s249
        %s251 = smul.u32 2, %s26
        %s252 = smul.u32 2, %s28
        %p253 = scmp.lt.s32.totalorder %s27, 2
        %s254 = scalar_select %p253, %s27, 2
        %s255 = scalar_lea.vmem %s2, %s254
        %s256 = smul.u32 2, %s26
        %p257 = scmp.eq.s32.totalorder %s28, 0
        // Predicated region
        $region41: #{tpu_custom_call.1} parent=31 // pred_check
          %p258 = pneg %p257
        $region42: #{tpu_custom_call.1} parent=31 // pred_check_branch
          %260 = sbr.rel (%p258) target = $region44
        $region43: #{tpu_custom_call.1} parent=31 // pred_region
          %261 = vst [vmem:[#allocation2] sm:$0xff] 0.0
          %262 = vst [vmem:[#allocation2 + $0x8] sm:$0xff] 0.0
        $region44: #{tpu_custom_call.1} parent=31 // pred_fallthru
          _
        %v263 = vld [vmem:[#allocation2] sm:$0xff]
        %v264 = vld [vmem:[#allocation2 + $0x8] sm:$0xff]
        %v265 = vld [vmem:[#allocation3] sm:$0xff]
        %v266 = vld [vmem:[#allocation3 + $0x8] sm:$0xff]
        %v267 = vld [vmem:[%s225] sm:$0xff]
        %v268 = vld [vmem:[%s225 + $0x8] sm:$0xff]
        %vm269 = vcmask 130048
        %v271 = vsel %vm269, %v265, 0
        %v274 = vsel %vm269, %v266, 0
        %276 = vmatprep.subr.mxu0 0.0
        %277 = vmatpush1.msra.mxu0 %v267
        %278 = vmatprep.subr.mxu0 0.0
        %279 = vmatpush1.msra.mxu0 %v268
        %280 = vmatprep.subr.mxu0 0.0
        %281 = vmatpush1.msra.mxu0 0.0
        %282 = vmatprep.subr.mxu0 0.0
        %283 = vmatpush1.msra.mxu0 0.0
        %284 = vmatprep.subr.mxu0 0.0
        %285 = vmatpush1.msra.mxu0 0.0
        %286 = vmatprep.subr.mxu0 0.0
        %287 = vmatpush1.msra.mxu0 0.0
        %288 = vmatprep.subr.mxu0 0.0
        %289 = vmatpush1.msra.mxu0 0.0
        %290 = vmatprep.subr.mxu0 0.0
        %291 = vmatpush1.msra.mxu0 0.0
        %292 = vmatprep.subr.mxu0 0.0
        %293 = vmatpush1.msra.mxu0 0.0
        %294 = vmatprep.subr.mxu0 0.0
        %295 = vmatpush1.msra.mxu0 0.0
        %296 = vmatprep.subr.mxu0 0.0
        %297 = vmatpush1.msra.mxu0 0.0
        %298 = vmatprep.subr.mxu0 0.0
        %299 = vmatpush1.msra.mxu0 0.0
        %300 = vmatprep.subr.mxu0 0.0
        %301 = vmatpush1.msra.mxu0 0.0
        %302 = vmatprep.subr.mxu0 0.0
        %303 = vmatpush1.msra.mxu0 0.0
        %304 = vmatprep.subr.mxu0 0.0
        %305 = vmatpush1.msra.mxu0 0.0
        %306 = vmatprep.subr.mxu0 0.0
        %307 = vmatpush1.msra.mxu0 0.0
        %308 = vmatprep.subr.mxu0 0.0
        %309 = vmatpush1.msra.mxu0 0.0
        %310 = vmatprep.subr.mxu0 0.0
        %311 = vmatpush1.msra.mxu0 0.0
        %312 = vmatprep.subr.mxu0 0.0
        %313 = vmatpush1.msra.mxu0 0.0
        %314 = vmatprep.subr.mxu0 0.0
        %315 = vmatpush1.msra.mxu0 0.0
        %316 = vmatprep.subr.mxu0 0.0
        %317 = vmatpush1.msra.mxu0 0.0
        %318 = vmatprep.subr.mxu0 0.0
        %319 = vmatpush1.msra.mxu0 0.0
        %320 = vmatprep.subr.mxu0 0.0
        %321 = vmatpush1.msra.mxu0 0.0
        %322 = vmatprep.subr.mxu0 0.0
        %323 = vmatpush1.msra.mxu0 0.0
        %324 = vmatprep.subr.mxu0 0.0
        %325 = vmatpush1.msra.mxu0 0.0
        %326 = vmatprep.subr.mxu0 0.0
        %327 = vmatpush1.msra.mxu0 0.0
        %328 = vmatprep.subr.mxu0 0.0
        %329 = vmatpush1.msra.mxu0 0.0
        %330 = vmatprep.subr.mxu0 0.0
        %331 = vmatpush1.msra.mxu0 0.0
        %332 = vmatprep.subr.mxu0 0.0
        %333 = vmatpush1.msra.mxu0 0.0
        %334 = vmatprep.subr.mxu0 0.0
        %335 = vmatpush1.msra.mxu0 0.0
        %336 = vmatprep.subr.mxu0 0.0
        %337 = vmatpush1.msra.mxu0 0.0
        %338 = vmatprep.subr.mxu0 0.0
        %339 = vmatpush1.msra.mxu0 0.0
        %340 = vmatprep.mubr.f32.mxu0 0.0
        %341 = vmatmul.mubr.f32.gmra.mrb[0].mxu0 %v271
        %v342 = vpop.f32.mrb[0].mxu0
        %v343 = vadd.f32 0.0, %v342
        %v344 = vpop.f32.mrb[0].mxu0
        %345 = vmatprep.mubr.f32.mxu0 0.0
        %346 = vmatmul.mubr.f32.gmra.mrb[0].mxu0 %v274
        %v347 = vpop.f32.mrb[0].mxu0
        %v348 = vadd.f32 0.0, %v347
        %v349 = vpop.f32.mrb[0].mxu0
        %350 = vdwg.mxu0
        %v351 = vadd.f32 %v263, %v343
        %v352 = vadd.f32 %v264, %v348
        %353 = vst [vmem:[#allocation2] sm:$0xff] %v351
        %354 = vst [vmem:[#allocation2 + $0x8] sm:$0xff] %v352
        // Predicated region
        $region45: #{tpu_custom_call.1} parent=31 // pred_check
          %p355 = pneg %p257
        $region46: #{tpu_custom_call.1} parent=31 // pred_check_branch
          %357 = sbr.rel (%p355) target = $region48
        $region47: #{tpu_custom_call.1} parent=31 // pred_region
          %v358 = vld [vmem:[#allocation2] sm:$0xff]
          %v359 = vld [vmem:[#allocation2 + $0x8] sm:$0xff]
          %v360 = vld [vmem:[%s255] sm:$0x1]
          %v362 = vlaneseq
          %v363 = vshrl.u32 %v362, 7
          %v364 = vsub.s32 0, %v363
          %v365 = vrot.slane %v360, %v364
          %v367 = vadd.f32 %v358, %v365
          %v368 = vadd.f32 %v359, %v365
          %369 = vst [vmem:[%s250] sm:$0xff] %v367
          %370 = vst [vmem:[%s250 + $0x8] sm:$0xff] %v368
        $region48: #{tpu_custom_call.1} parent=31 // pred_fallthru
          _
        %s371 = sand.u32 %s132, 1
        %s372 = scalar_lea.sflag [#allocation5], %s371
        %s373 = sand.u32 %s132, 1
        %s374 = smul.addr %s373, 16
        %s375 = scalar_lea.vmem [#allocation8], %s374
        // Predicated region
        $region49: #{tpu_custom_call.1} parent=31 // pred_check
          %p376 = pneg %p142
        $region50: #{tpu_custom_call.1} parent=31 // pred_check_branch
          %378 = sbr.rel (%p376) target = $region52
        $region51: #{tpu_custom_call.1} parent=31 // pred_region
          %s379 = smul.u32 2, %s26
          %s381 = ssub.s32 256, 256
          %382 = vsyncadd %s372, %s381
          %s383 = smul.addr %s379, 3
          %s384 = sadd.s32 %s27, %s383
          %s385 = smul.addr %s384, 128
          %s386 = scalar_lea.hbm %s3, %s385
          %s387 = sshll.u32 %s375, 4
          %s388 = int_to_ptr.vmem [resolvable:$true] %s387
          %393 = dma.vmem_to_hbm [thread:$0]  %s388, 256, %s386, %s372, 128, 384, 8
        $region52: #{tpu_custom_call.1} parent=31 // pred_fallthru
          _
      $region32: #{tpu_custom_call.1} parent=5 // pred_fallthru
        _
      %p394 = scmp.le.s32.totalorder 2, %s16
      // Predicated region
      $region53: #{tpu_custom_call.1} parent=5 // pred_check
        %p395 = pneg %p394
      $region54: #{tpu_custom_call.1} parent=5 // pred_check_branch
        %397 = sbr.rel (%p395) target = $region56
      $region55: #{tpu_custom_call.1} parent=5 // pred_region
        %s398 = ssub.s32 %s16, 2
        // Predicated region
        $region57: #{tpu_custom_call.1} parent=55 // pred_check
          %p399 = pneg %p148
        $region58: #{tpu_custom_call.1} parent=55 // pred_check_branch
          %401 = sbr.rel (%p399) target = $region60
        $region59: #{tpu_custom_call.1} parent=55 // pred_region
          %s402 = sand.u32 %s133, 1
          %s403 = scalar_lea.sflag [#allocation5], %s402
          %s404 = sand.u32 %s133, 1
          %s405 = smul.addr %s404, 16
          %s406 = scalar_lea.vmem [#allocation8], %s405
          %407 = dma.done %s403, 256
        $region60: #{tpu_custom_call.1} parent=55 // pred_fallthru
          _
      $region56: #{tpu_custom_call.1} parent=5 // pred_fallthru
        _
    $region6: #{tpu_custom_call.1} parent=1 // loop_footer
      %s20 = sadd.s32 1, %s16
    $region7: #{tpu_custom_call.1} parent=1 // loop_footer_branch
      %15 = sbr.rel target = $region3
    $region8: #{tpu_custom_call.1} parent=1 // loop_exit
      _
    %408 = vsyncpa [#allocation4], 1
    %s409 = scalar_lea.sflag [#allocation4], 1
    %410 = vsyncpa %s409, 1
    %411 = vsyncpa [#allocation7], 1
    %s412 = scalar_lea.sflag [#allocation7], 1
    %413 = vsyncpa %s412, 1
    %414 = vsyncpa [#allocation5], 1
    %s415 = scalar_lea.sflag [#allocation5], 1
    %416 = vsyncpa %s415, 1

</llo_original>
